<compile_context>
chip_gen: v7x
topology: tpu7x:2x2x1
jax: 0.10.0
libtpu: 0.0.40
codegen_flags: <defaults>
</compile_context>

<pallas_src>
import math

import jax
import jax.numpy as jnp
import numpy as np
from jax.experimental import pallas as pl
from jax.experimental.pallas import tpu as pltpu


def _desc_matching_kernel(x1_ref, x2_ref, x2w_ref, bias_ref,
                          out_fc_ref, out_norm_ref):
    x1 = x1_ref[0]            # (TM, C)     descriptors, channels-last
    x2 = x2_ref[0]            # (C, TN)     descriptors, natural layout
    x2w = x2w_ref[0]          # (C, TN*O)   weight-scaled, lane-interleaved

    # ---- fc path: ONE wide NN matmul, output already in final layout ----
    # fc[i, j*O + o] = sum_c x1[i, c] * x2[c, j] * W[o, c]
    fc = jax.lax.dot_general(
        x1, x2w,
        dimension_numbers=(((1,), (0,)), ((), ())),
        preferred_element_type=jnp.float32)                 # (TM, TN*O)
    out_fc_ref[0] = (fc + bias_ref[...]).astype(out_fc_ref.dtype)

    # ---- norm path: Gram identity with diagonal scaling ----
    s1 = jnp.sum(x1 * x1, axis=-1, keepdims=True)            # (TM, 1)
    s2 = jnp.sum(x2 * x2, axis=0, keepdims=True)              # (1, TN) sublane reduce
    inv1 = pl.reciprocal(1e-6 + jnp.sqrt(s1), approx=False)   # matches x/(1e-6+||x||)
    inv2 = pl.reciprocal(1e-6 + jnp.sqrt(s2), approx=False)
    gram = jax.lax.dot_general(
        x1, x2,
        dimension_numbers=(((1,), (0,)), ((), ())),
        preferred_element_type=jnp.float32)                   # (TM, TN)
    gram_u = gram * inv1 * inv2                                # <u1_i, u2_j>
    u1_sq = s1 * inv1 * inv1                                   # ||u1_i||^2
    u2_sq = s2 * inv2 * inv2                                   # ||u2_j||^2
    dist_sq = jnp.maximum(u1_sq + u2_sq - 2.0 * gram_u, 0.0)
    out_norm_ref[0] = jnp.sqrt(dist_sq).astype(out_norm_ref.dtype)


def _choose_tile(n, candidates):
    """Largest candidate tile dividing n; else the full extent (always legal)."""
    for t in candidates:
        if t <= n and n % t == 0:
            return t
    return n


def _footprint_bytes(tm, tn, c, o):
    """Double-buffered f32 VMEM footprint of one grid step."""
    per_step = (tm * tn * o      # fc output block (dominant)
                + tm * tn        # norm output block
                + c * tn * o     # x2w block
                + c * tn         # x2 block
                + tm * c         # x1 block
                + tn * o)        # bias row
    return 2 * 4 * per_step


def desc_matching_forward(out1, out2, weight, bias):
    """out1: (B, C, D1, H1, W1), out2: (B, C, D2, H2, W2).

    Returns (fc (B*N1*N2, O), out_norm (B, N1, N2)) matching the PyTorch module.
    """
    b, c, d1, h1, w1 = out1.shape
    _, _, d2, h2, w2 = out2.shape
    n1 = d1 * h1 * w1
    n2 = d2 * h2 * w2
    o = weight.shape[0]

    w32 = weight.astype(jnp.float32)
    # out1 -> channels-last matmul LHS (one-time, tiny vs fc output bytes).
    x1 = jnp.transpose(out1.reshape(b, c, n1), (0, 2, 1)).astype(jnp.float32)
    # out2 stays in its natural (B, C, N2) layout -> no input transpose.
    x2 = out2.reshape(b, c, n2).astype(jnp.float32)
    # Weight-scaled, lane-interleaved RHS: x2w[b, c, j*O+o] = x2[b,c,j] * W[o,c]
    x2w = (x2[:, :, :, None] * jnp.transpose(w32)[None, :, None, :]
           ).reshape(b, c, n2 * o)

    # Tile selection: sublane tile TM (mult. of 8), lane tile TN (mult. of 128),
    # largest that divides; then budget-checked so the double-buffered
    # footprint fits every generation (v7x: 64 MiB physical; v5e: 16 MiB
    # default scoped -> explicit vmem_limit_bytes below).
    tm = _choose_tile(n1, (512, 256, 128, 64, 32, 16, 8))
    tn = _choose_tile(n2, (1024, 512, 256, 128))
    budget = 24 << 20
    while (_footprint_bytes(tm, tn, c, o) > budget and tn % 2 == 0
           and tn // 2 >= 128 and n2 % (tn // 2) == 0):
        tn //= 2
    while (_footprint_bytes(tm, tn, c, o) > budget and tm % 2 == 0
           and tm // 2 >= 8 and n1 % (tm // 2) == 0):
        tm //= 2
    vmem_limit = int(min(max(2 * _footprint_bytes(tm, tn, c, o), 32 << 20),
                         96 << 20))

    # bias lane pattern: bias_row[0, j*O + o] = bias[o]  (resident, fetched once)
    bias_row = jnp.tile(bias.astype(jnp.float32).reshape(o), tn).reshape(1, tn * o)

    grid = (b, n1 // tm, n2 // tn)

    out_fc, out_norm = pl.pallas_call(
        _desc_matching_kernel,
        out_shape=(
            jax.ShapeDtypeStruct((b, n1, n2 * o), jnp.float32),  # final layout
            jax.ShapeDtypeStruct((b, n1, n2), jnp.float32),
        ),
        grid_spec=pltpu.PrefetchScalarGridSpec(
            num_scalar_prefetch=0,
            grid=grid,
            in_specs=[
                pl.BlockSpec((1, tm, c), lambda bi, i, j: (bi, i, 0)),
                pl.BlockSpec((1, c, tn), lambda bi, i, j: (bi, 0, j)),
                pl.BlockSpec((1, c, tn * o), lambda bi, i, j: (bi, 0, j)),
                pl.BlockSpec((1, tn * o), lambda bi, i, j: (0, 0)),
            ],
            out_specs=[
                pl.BlockSpec((1, tm, tn * o), lambda bi, i, j: (bi, i, j)),
                pl.BlockSpec((1, tm, tn), lambda bi, i, j: (bi, i, j)),
            ],
        ),
        compiler_params=pltpu.CompilerParams(
            dimension_semantics=("parallel", "parallel", "parallel"),
            vmem_limit_bytes=vmem_limit),
    )(x1, x2, x2w, bias_row)

    # Free reshape: (B, N1, N2*O) is already the row-major (B*N1*N2, O) layout.
    fc = out_fc.reshape(b * n1 * n2, o)
    return fc, out_norm


def _reference(out1, out2, weight, bias):
    """Pure-JAX transcription of the PyTorch forward (for verification)."""
    b, c, d1, h1, w1 = out1.shape
    _, _, d2, h2, w2 = out2.shape
    n1 = d1 * h1 * w1
    n2 = d2 * h2 * w2
    x1 = jnp.transpose(out1.reshape(b, c, n1), (0, 2, 1))[:, :, None, :]
    x2 = jnp.transpose(out2.reshape(b, c, n2), (0, 2, 1))[:, None, :, :]
    prod = (x1 * x2).reshape(-1, c)
    fc = prod @ weight.T + bias
    dn1 = jnp.linalg.norm(x1, axis=3, keepdims=True)
    u1 = x1 / (1e-6 + dn1)
    dn2 = jnp.linalg.norm(x2, axis=3, keepdims=True)
    u2 = x2 / (1e-6 + dn2)
    out_norm = jnp.linalg.norm(u1 - u2, axis=3)
    return fc, out_norm


if __name__ == "__main__":
    # Small shapes consistent with the module's 5-D inputs.
    B, C = 2, 32                      # in_channels = C
    D1 = H1 = W1 = 2                  # N1 = 8
    D2 = H2 = W2 = 4                  # N2 = 64
    O = 2                             # out_channels

    key = jax.random.PRNGKey(0)
    k1, k2, kw, kb = jax.random.split(key, 4)
    out1 = jax.random.normal(k1, (B, C, D1, H1, W1), dtype=jnp.float32)
    out2 = jax.random.normal(k2, (B, C, D2, H2, W2), dtype=jnp.float32)

    # Deterministic "kaiming_normal_"-style Linear weights (fan_in = C).
    weight = jax.random.normal(kw, (O, C), dtype=jnp.float32) * math.sqrt(2.0 / C)
    # Non-zero bias to exercise the bias path (module init is 0; forward is generic).
    bias = 0.1 * jax.random.normal(kb, (O,), dtype=jnp.float32)

    fc_out, norm_out = desc_matching_forward(out1, out2, weight, bias)
    jax.block_until_ready((fc_out, norm_out))

    fc_ref, norm_ref = _reference(out1, out2, weight, bias)
    np.testing.assert_allclose(np.asarray(fc_out), np.asarray(fc_ref),
                               rtol=1e-4, atol=1e-5)
    np.testing.assert_allclose(np.asarray(norm_out), np.asarray(norm_ref),
                               rtol=1e-4, atol=1e-5)

    print("KERNEL_OK")
</pallas_src>

<mosaic_0001>
module attributes {stable_mosaic.version = 11 : i64} {
  func.func @_desc_matching_kernel(%arg0: i32, %arg1: i32, %arg2: i32, %arg3: memref<1x8x32xf32, #tpu.memory_space<vmem>>, %arg4: memref<1x32x64xf32, #tpu.memory_space<vmem>>, %arg5: memref<1x32x128xf32, #tpu.memory_space<vmem>>, %arg6: memref<1x128xf32, #tpu.memory_space<vmem>>, %arg7: memref<1x8x128xf32, #tpu.memory_space<vmem>>, %arg8: memref<1x8x64xf32, #tpu.memory_space<vmem>>) attributes {dimension_semantics = [#tpu.dimension_semantics<parallel>, #tpu.dimension_semantics<parallel>, #tpu.dimension_semantics<parallel>], iteration_bounds = array<i64: 2, 1, 1>, scalar_prefetch = 0 : i64, scratch_operands = 0 : i64, tpu.core_type = #tpu.core_type<tc>, window_params = [{transform_indices = @transform_0, window_bounds = array<i64: 1, 8, 32>}, {transform_indices = @transform_1, window_bounds = array<i64: 1, 32, 64>}, {transform_indices = @transform_2, window_bounds = array<i64: 1, 32, 128>}, {pipeline_mode = #tpu.pipeline_mode<synchronous>, transform_indices = @transform_3, window_bounds = array<i64: 1, 128>}, {transform_indices = @transform_4, window_bounds = array<i64: 1, 8, 128>}, {transform_indices = @transform_5, window_bounds = array<i64: 1, 8, 64>}]} {
    %c0 = arith.constant 0 : index
    %c0_0 = arith.constant 0 : index
    %c0_1 = arith.constant 0 : index
    %0 = vector.load %arg3[%c0, %c0_0, %c0_1] : memref<1x8x32xf32, #tpu.memory_space<vmem>>, vector<1x8x32xf32>
    %1 = vector.shape_cast %0 : vector<1x8x32xf32> to vector<8x32xf32>
    %c0_2 = arith.constant 0 : index
    %c0_3 = arith.constant 0 : index
    %c0_4 = arith.constant 0 : index
    %2 = vector.load %arg4[%c0_2, %c0_3, %c0_4] : memref<1x32x64xf32, #tpu.memory_space<vmem>>, vector<1x32x64xf32>
    %3 = vector.shape_cast %2 : vector<1x32x64xf32> to vector<32x64xf32>
    %c0_5 = arith.constant 0 : index
    %c0_6 = arith.constant 0 : index
    %c0_7 = arith.constant 0 : index
    %4 = vector.load %arg5[%c0_5, %c0_6, %c0_7] : memref<1x32x128xf32, #tpu.memory_space<vmem>>, vector<1x32x128xf32>
    %5 = vector.shape_cast %4 : vector<1x32x128xf32> to vector<32x128xf32>
    %cst = arith.constant dense<0.000000e+00> : vector<8x128xf32>
    %6 = tpu.matmul %1, %5, %cst {dimension_numbers = #tpu.dot_dimension_numbers<[1], [0], [0], [1], [0, 0, 1, 1], [], []>} : vector<8x32xf32>, vector<32x128xf32>, vector<8x128xf32> -> vector<8x128xf32>
    %c0_8 = arith.constant 0 : index
    %c0_9 = arith.constant 0 : index
    %7 = vector.load %arg6[%c0_8, %c0_9] : memref<1x128xf32, #tpu.memory_space<vmem>>, vector<1x128xf32>
    %8 = vector.broadcast %7 : vector<1x128xf32> to vector<8x128xf32>
    %9 = arith.addf %6, %8 : vector<8x128xf32>
    %c0_10 = arith.constant 0 : index
    %c0_11 = arith.constant 0 : index
    %c0_12 = arith.constant 0 : index
    %10 = vector.load %arg7[%c0_10, %c0_11, %c0_12] : memref<1x8x128xf32, #tpu.memory_space<vmem>>, vector<1x8x128xf32>
    %11 = vector.shape_cast %10 : vector<1x8x128xf32> to vector<8x128xf32>
    %12 = vector.shape_cast %9 : vector<8x128xf32> to vector<1x8x128xf32>
    tpu.vector_store %arg7[%c0_10, %c0_11, %c0_12], %12 {strides = array<i32>} : memref<1x8x128xf32, #tpu.memory_space<vmem>>, vector<1x8x128xf32>,
    %13 = arith.mulf %1, %1 : vector<8x32xf32>
    %cst_13 = arith.constant dense<0.000000e+00> : vector<8xf32>
    %14 = vector.multi_reduction <add>, %13, %cst_13 [1] : vector<8x32xf32> to vector<8xf32>
    %15 = vector.shape_cast %14 : vector<8xf32> to vector<8x1xf32>
    %16 = arith.mulf %3, %3 : vector<32x64xf32>
    %cst_14 = arith.constant dense<0.000000e+00> : vector<64xf32>
    %17 = vector.multi_reduction <add>, %16, %cst_14 [0] : vector<32x64xf32> to vector<64xf32>
    %18 = vector.shape_cast %17 : vector<64xf32> to vector<1x64xf32>
    %19 = math.sqrt %15 : vector<8x1xf32>
    %cst_15 = arith.constant 9.99999997E-7 : f32
    %20 = vector.broadcast %cst_15 : f32 to vector<8x1xf32>
    %21 = arith.addf %20, %19 : vector<8x1xf32>
    %22 = tpu.reciprocal %21 : vector<8x1xf32> -> vector<8x1xf32>
    %23 = math.sqrt %18 : vector<1x64xf32>
    %cst_16 = arith.constant 9.99999997E-7 : f32
    %24 = vector.broadcast %cst_16 : f32 to vector<1x64xf32>
    %25 = arith.addf %24, %23 : vector<1x64xf32>
    %26 = tpu.reciprocal %25 : vector<1x64xf32> -> vector<1x64xf32>
    %cst_17 = arith.constant dense<0.000000e+00> : vector<8x64xf32>
    %27 = tpu.matmul %1, %3, %cst_17 {dimension_numbers = #tpu.dot_dimension_numbers<[1], [0], [0], [1], [0, 0, 1, 1], [], []>} : vector<8x32xf32>, vector<32x64xf32>, vector<8x64xf32> -> vector<8x64xf32>
    %28 = vector.broadcast %22 : vector<8x1xf32> to vector<8x64xf32>
    %29 = arith.mulf %27, %28 : vector<8x64xf32>
    %30 = vector.broadcast %26 : vector<1x64xf32> to vector<8x64xf32>
    %31 = arith.mulf %29, %30 : vector<8x64xf32>
    %32 = arith.mulf %15, %22 : vector<8x1xf32>
    %33 = arith.mulf %32, %22 : vector<8x1xf32>
    %34 = arith.mulf %18, %26 : vector<1x64xf32>
    %35 = arith.mulf %34, %26 : vector<1x64xf32>
    %36 = vector.broadcast %33 : vector<8x1xf32> to vector<8x64xf32>
    %37 = vector.broadcast %35 : vector<1x64xf32> to vector<8x64xf32>
    %38 = arith.addf %36, %37 : vector<8x64xf32>
    %cst_18 = arith.constant 2.000000e+00 : f32
    %39 = vector.broadcast %cst_18 : f32 to vector<8x64xf32>
    %40 = arith.mulf %39, %31 : vector<8x64xf32>
    %41 = arith.subf %38, %40 : vector<8x64xf32>
    %cst_19 = arith.constant 0.000000e+00 : f32
    %42 = vector.broadcast %cst_19 : f32 to vector<8x64xf32>
    %43 = arith.maximumf %41, %42 : vector<8x64xf32>
    %44 = math.sqrt %43 : vector<8x64xf32>
    %c0_20 = arith.constant 0 : index
    %c0_21 = arith.constant 0 : index
    %c0_22 = arith.constant 0 : index
    %45 = vector.load %arg8[%c0_20, %c0_21, %c0_22] : memref<1x8x64xf32, #tpu.memory_space<vmem>>, vector<1x8x64xf32>
    %46 = vector.shape_cast %45 : vector<1x8x64xf32> to vector<8x64xf32>
    %47 = vector.shape_cast %44 : vector<8x64xf32> to vector<1x8x64xf32>
    tpu.vector_store %arg8[%c0_20, %c0_21, %c0_22], %47 {strides = array<i32>} : memref<1x8x64xf32, #tpu.memory_space<vmem>>, vector<1x8x64xf32>,
    return
  }
  func.func @transform_0(%arg0: i32, %arg1: i32, %arg2: i32) -> (i32, i32, i32) {
    %c0_i32 = arith.constant 0 : i32
    %c0_i32_0 = arith.constant 0 : i32
    return %arg0, %arg1, %c0_i32 : i32, i32, i32
  }
  func.func @transform_1(%arg0: i32, %arg1: i32, %arg2: i32) -> (i32, i32, i32) {
    %c0_i32 = arith.constant 0 : i32
    %c0_i32_0 = arith.constant 0 : i32
    return %arg0, %c0_i32, %arg2 : i32, i32, i32
  }
  func.func @transform_2(%arg0: i32, %arg1: i32, %arg2: i32) -> (i32, i32, i32) {
    %c0_i32 = arith.constant 0 : i32
    %c0_i32_0 = arith.constant 0 : i32
    return %arg0, %c0_i32, %arg2 : i32, i32, i32
  }
  func.func @transform_3(%arg0: i32, %arg1: i32, %arg2: i32) -> (i32, i32) {
    %c0_i32 = arith.constant 0 : i32
    %c0_i32_0 = arith.constant 0 : i32
    %c0_i32_1 = arith.constant 0 : i32
    return %c0_i32, %c0_i32_0 : i32, i32
  }
  func.func @transform_4(%arg0: i32, %arg1: i32, %arg2: i32) -> (i32, i32, i32) {
    %c0_i32 = arith.constant 0 : i32
    return %arg0, %arg1, %arg2 : i32, i32, i32
  }
  func.func @transform_5(%arg0: i32, %arg1: i32, %arg2: i32) -> (i32, i32, i32) {
    %c0_i32 = arith.constant 0 : i32
    return %arg0, %arg1, %arg2 : i32, i32, i32
  }
}

</mosaic_0001>

<llo_original>
// kernel: tpu_custom_call.1
$region0: #{tpu_custom_call.1}
  #allocation0 [shape = 'u32[]', space=smem, size = 0x4, offset = 0x4, fixed_abs, tag = 'smem constant byte address 0x4 - core index']
  #allocation1 [shape = 'u32[144,128]{1,0:T(1,128)}', space=vmem, size = 0x12000, scoped, tag = 'internal scratch']
  %s0 = inlined_call_operand.hbm [shape: f32[2,8,32], index: 0, kind: input, shape index: {}]
  %s1 = inlined_call_operand.hbm [shape: f32[2,32,64], index: 1, kind: input, shape index: {}]
  %s2 = inlined_call_operand.hbm [shape: f32[2,32,128], index: 2, kind: input, shape index: {}]
  %s3 = inlined_call_operand.vmem [shape: f32[1,128], index: 3, kind: input, shape index: {}]
  %s4 = inlined_call_operand.hbm [shape: f32[2,8,128], index: 4, kind: output, shape index: {0}]
  %s5 = inlined_call_operand.hbm [shape: f32[2,8,64], index: 5, kind: output, shape index: {1}]
  %6 = xla_tuple %s4, %s5
  %s7 = sld [smem:[#allocation0]]
  $region69: #{tpu_custom_call.1} parent=0
    _
  %s9 = ssub.s32 1, %s7
  %s10 = scalar_select 0, %s9, %s7
  $region1: #{tpu_custom_call.1} parent=0
    #allocation2 [shape = 'u8[8192]{0}', space=vmem, size = 0x2000, scoped, tag = 'input window, operand 0']
    #allocation3 [shape = 's32[2]{0}', space=sflag, size = 0x8, scoped, tag = 'scoped memory for tpu_custom_call.1']
    #allocation4 [shape = 's32[2]{0}', space=sflag, size = 0x8, scoped, tag = 'scoped memory for tpu_custom_call.1']
    #allocation5 [shape = 'u8[32768]{0}', space=vmem, size = 0x8000, scoped, tag = 'input window, operand 1']
    #allocation6 [shape = 's32[2]{0}', space=sflag, size = 0x8, scoped, tag = 'scoped memory for tpu_custom_call.1']
    #allocation7 [shape = 'u8[32768]{0}', space=vmem, size = 0x8000, scoped, tag = 'input window, operand 2']
    #allocation8 [shape = 'u8[8192]{0}', space=vmem, size = 0x2000, scoped, tag = 'output window, operand 0']
    #allocation9 [shape = 'u8[8192]{0}', space=vmem, size = 0x2000, scoped, tag = 'output window, operand 1']
    #allocation10 [shape = 's32[2]{0}', space=sflag, size = 0x8, scoped, tag = 'scoped memory for tpu_custom_call.1']
    %11 = vsyncpa [#allocation3], 0
    %s12 = scalar_lea.sflag [#allocation3], 1
    %13 = vsyncpa %s12, 0
    %14 = vsyncpa [#allocation6], 0
    %s15 = scalar_lea.sflag [#allocation6], 1
    %16 = vsyncpa %s15, 0
    %17 = vsyncpa [#allocation4], 0
    %s18 = scalar_lea.sflag [#allocation4], 1
    %19 = vsyncpa %s18, 0
    %20 = vsyncpa [#allocation10], 0
    %s21 = scalar_lea.sflag [#allocation10], 1
    %22 = vsyncpa %s21, 0
    loop: start=0, step=1, limit=4
    $region2: #{tpu_custom_call.1} parent=1 // loop_pre_header
      _
    $region3: #{tpu_custom_call.1} parent=1 // loop_header
      %s24 = sphi 0, %s28
      %p25 = scmp.ge.s32.totalorder %s24, 4
      %s31 = sphi 0, %s50
      %s32 = sphi 0, %s46
      %s33 = sphi 0, %s42
      %s34 = sphi 0, %s31
      %s35 = sphi 0, %s32
      %s36 = sphi 0, %s33
      %s37 = sphi 0, %s34
      %s38 = sphi 0, %s35
      %s39 = sphi 0, %s36
      %s55 = sphi 0, %s57
      %s58 = sphi 0, %s55
      %s59 = sphi 0, %s58
      %s75 = sphi 0, %s59
      %s83 = sphi 0, %s85
      %s86 = sphi 0, %s83
      %s87 = sphi 0, %s86
      %s103 = sphi 0, %s87
      %s111 = sphi 0, %s113
      %s114 = sphi 0, %s111
      %s115 = sphi 0, %s114
      %s131 = sphi 0, %s115
      %s135 = sphi 0, %s135
      %s137 = sphi 0, %s135
      %s138 = sphi 0, %s137
      %s152 = sphi 0, %s138
      %s162 = sphi 0, %s164
      %s165 = sphi 0, %s162
      %s166 = sphi 0, %s165
      %s182 = sphi 0, %s166
      %s192 = sphi 0, %s194
      %s195 = sphi 0, %s192
      %s196 = sphi 0, %s195
      %s212 = sphi 0, %s196
    $region4: #{tpu_custom_call.1} parent=1 // loop_header_branch
      %27 = sbr.rel (%p25) target = $region8
    $region5: #{tpu_custom_call.1} parent=1 // loop_body
      %s29 = ssub.s32 %s24, 1
      %s30 = ssub.s32 %s24, 2
      %s40 = sadd.s32 1, %s33
      %p41 = scmp.ge.s32.totalorder %s40, 1
      %s42 = scalar_select %p41, 0, %s40
      %s43 = sadd.s32 1, %s32
      %s44 = scalar_select %p41, %s43, %s32
      %p45 = scmp.ge.s32.totalorder %s44, 1
      %s46 = scalar_select %p45, 0, %s44
      %s47 = sadd.s32 1, %s31
      %s48 = scalar_select %p45, %s47, %s31
      %p49 = scmp.ge.s32.totalorder %s48, 2
      %s50 = scalar_select %p49, 0, %s48
      %s51 = ssub.s32 %s31, %s50
      %s52 = ssub.s32 %s32, %s46
      %s53 = sor.u32 %s51, %s52
      %p54 = scmp.eq.s32.totalorder %s53, 0
      %s56 = sadd.s32 %s55, 1
      %s57 = scalar_select %p54, %s55, %s56
      %p60 = pneg %p54
      %p61 = scmp.eq.s32.totalorder %s24, 1
      %p62 = por %p60, %p61
      %p63 = scmp.ne.s32.totalorder %s55, %s58
      %p64 = scmp.eq.s32.totalorder %s24, 0
      %p65 = por %p63, %p64
      %p66 = scmp.ne.s32.totalorder %s55, %s58
      %p67 = scmp.eq.s32.totalorder %s29, 1
      %p68 = por %p66, %p67
      %p69 = scmp.ne.s32.totalorder %s58, %s59
      %p70 = scmp.eq.s32.totalorder %s29, 0
      %p71 = por %p69, %p70
      %p72 = scmp.ne.s32.totalorder %s58, %s59
      %p73 = scmp.eq.s32.totalorder %s30, 1
      %p74 = por %p72, %p73
      %p76 = scmp.ne.s32.totalorder %s59, %s75
      %p77 = scmp.eq.s32.totalorder %s30, 0
      %p78 = por %p76, %p77
      %s79 = ssub.s32 %s31, %s50
      %s80 = ssub.s32 %s33, %s42
      %s81 = sor.u32 %s79, %s80
      %p82 = scmp.eq.s32.totalorder %s81, 0
      %s84 = sadd.s32 %s83, 1
      %s85 = scalar_select %p82, %s83, %s84
      %p88 = pneg %p82
      %p89 = scmp.eq.s32.totalorder %s24, 1
      %p90 = por %p88, %p89
      %p91 = scmp.ne.s32.totalorder %s83, %s86
      %p92 = scmp.eq.s32.totalorder %s24, 0
      %p93 = por %p91, %p92
      %p94 = scmp.ne.s32.totalorder %s83, %s86
      %p95 = scmp.eq.s32.totalorder %s29, 1
      %p96 = por %p94, %p95
      %p97 = scmp.ne.s32.totalorder %s86, %s87
      %p98 = scmp.eq.s32.totalorder %s29, 0
      %p99 = por %p97, %p98
      %p100 = scmp.ne.s32.totalorder %s86, %s87
      %p101 = scmp.eq.s32.totalorder %s30, 1
      %p102 = por %p100, %p101
      %p104 = scmp.ne.s32.totalorder %s87, %s103
      %p105 = scmp.eq.s32.totalorder %s30, 0
      %p106 = por %p104, %p105
      %s107 = ssub.s32 %s31, %s50
      %s108 = ssub.s32 %s33, %s42
      %s109 = sor.u32 %s107, %s108
      %p110 = scmp.eq.s32.totalorder %s109, 0
      %s112 = sadd.s32 %s111, 1
      %s113 = scalar_select %p110, %s111, %s112
      %p116 = pneg %p110
      %p117 = scmp.eq.s32.totalorder %s24, 1
      %p118 = por %p116, %p117
      %p119 = scmp.ne.s32.totalorder %s111, %s114
      %p120 = scmp.eq.s32.totalorder %s24, 0
      %p121 = por %p119, %p120
      %p122 = scmp.ne.s32.totalorder %s111, %s114
      %p123 = scmp.eq.s32.totalorder %s29, 1
      %p124 = por %p122, %p123
      %p125 = scmp.ne.s32.totalorder %s114, %s115
      %p126 = scmp.eq.s32.totalorder %s29, 0
      %p127 = por %p125, %p126
      %p128 = scmp.ne.s32.totalorder %s114, %s115
      %p129 = scmp.eq.s32.totalorder %s30, 1
      %p130 = por %p128, %p129
      %p132 = scmp.ne.s32.totalorder %s115, %s131
      %p133 = scmp.eq.s32.totalorder %s30, 0
      %p134 = por %p132, %p133
      %s136 = sadd.s32 %s135, 1
      %p139 = scmp.eq.s32.totalorder %s24, 1
      %p140 = scmp.ne.s32.totalorder %s135, %s137
      %p141 = scmp.eq.s32.totalorder %s24, 0
      %p142 = por %p140, %p141
      %p143 = scmp.ne.s32.totalorder %s135, %s137
      %p144 = scmp.eq.s32.totalorder %s29, 1
      %p145 = por %p143, %p144
      %p146 = scmp.ne.s32.totalorder %s137, %s138
      %p147 = scmp.eq.s32.totalorder %s29, 0
      %p148 = por %p146, %p147
      %p149 = scmp.ne.s32.totalorder %s137, %s138
      %p150 = scmp.eq.s32.totalorder %s30, 1
      %p151 = por %p149, %p150
      %p153 = scmp.ne.s32.totalorder %s138, %s152
      %p154 = scmp.eq.s32.totalorder %s30, 0
      %p155 = por %p153, %p154
      %s156 = ssub.s32 %s31, %s50
      %s157 = ssub.s32 %s32, %s46
      %s158 = sor.u32 %s156, %s157
      %s159 = ssub.s32 %s33, %s42
      %s160 = sor.u32 %s158, %s159
      %p161 = scmp.eq.s32.totalorder %s160, 0
      %s163 = sadd.s32 %s162, 1
      %s164 = scalar_select %p161, %s162, %s163
      %p167 = pneg %p161
      %p168 = scmp.eq.s32.totalorder %s24, 1
      %p169 = por %p167, %p168
      %p170 = scmp.ne.s32.totalorder %s162, %s165
      %p171 = scmp.eq.s32.totalorder %s24, 0
      %p172 = por %p170, %p171
      %p173 = scmp.ne.s32.totalorder %s162, %s165
      %p174 = scmp.eq.s32.totalorder %s29, 1
      %p175 = por %p173, %p174
      %p176 = scmp.ne.s32.totalorder %s165, %s166
      %p177 = scmp.eq.s32.totalorder %s29, 0
      %p178 = por %p176, %p177
      %p179 = scmp.ne.s32.totalorder %s165, %s166
      %p180 = scmp.eq.s32.totalorder %s30, 1
      %p181 = por %p179, %p180
      %p183 = scmp.ne.s32.totalorder %s166, %s182
      %p184 = scmp.eq.s32.totalorder %s30, 0
      %p185 = por %p183, %p184
      %s186 = ssub.s32 %s31, %s50
      %s187 = ssub.s32 %s32, %s46
      %s188 = sor.u32 %s186, %s187
      %s189 = ssub.s32 %s33, %s42
      %s190 = sor.u32 %s188, %s189
      %p191 = scmp.eq.s32.totalorder %s190, 0
      %s193 = sadd.s32 %s192, 1
      %s194 = scalar_select %p191, %s192, %s193
      %p197 = pneg %p191
      %p198 = scmp.eq.s32.totalorder %s24, 1
      %p199 = por %p197, %p198
      %p200 = scmp.ne.s32.totalorder %s192, %s195
      %p201 = scmp.eq.s32.totalorder %s24, 0
      %p202 = por %p200, %p201
      %p203 = scmp.ne.s32.totalorder %s192, %s195
      %p204 = scmp.eq.s32.totalorder %s29, 1
      %p205 = por %p203, %p204
      %p206 = scmp.ne.s32.totalorder %s195, %s196
      %p207 = scmp.eq.s32.totalorder %s29, 0
      %p208 = por %p206, %p207
      %p209 = scmp.ne.s32.totalorder %s195, %s196
      %p210 = scmp.eq.s32.totalorder %s30, 1
      %p211 = por %p209, %p210
      %p213 = scmp.ne.s32.totalorder %s196, %s212
      %p214 = scmp.eq.s32.totalorder %s30, 0
      %p215 = por %p213, %p214
      %p216 = scmp.le.s32.totalorder 1, %s24
      %p217 = scmp.lt.s32.totalorder %s24, 3
      %p218 = pnand %p216, %p217
      %p219 = pneg %p218
      // Predicated region
      $region9: #{tpu_custom_call.1} parent=5 // pred_check
        _
      $region10: #{tpu_custom_call.1} parent=5 // pred_check_branch
        %221 = sbr.rel (%p218) target = $region12
      $region11: #{tpu_custom_call.1} parent=5 // pred_region
        %s222 = ssub.s32 %s24, 1
        // Predicated region
        $region13: #{tpu_custom_call.1} parent=11 // pred_check
          %p223 = pneg %p148
        $region14: #{tpu_custom_call.1} parent=11 // pred_check_branch
          %225 = sbr.rel (%p223) target = $region16
        $region15: #{tpu_custom_call.1} parent=11 // pred_region
          _
        $region16: #{tpu_custom_call.1} parent=11 // pred_fallthru
          _
      $region12: #{tpu_custom_call.1} parent=5 // pred_fallthru
        _
      %p226 = scmp.lt.s32.totalorder %s24, 2
      // Predicated region
      $region17: #{tpu_custom_call.1} parent=5 // pred_check
        %p227 = pneg %p226
      $region18: #{tpu_custom_call.1} parent=5 // pred_check_branch
        %229 = sbr.rel (%p227) target = $region20
      $region19: #{tpu_custom_call.1} parent=5 // pred_region
        // Predicated region
        $region21: #{tpu_custom_call.1} parent=19 // pred_check
          %p230 = pneg %p65
        $region22: #{tpu_custom_call.1} parent=19 // pred_check_branch
          %232 = sbr.rel (%p230) target = $region24
        $region23: #{tpu_custom_call.1} parent=19 // pred_region
          %s233 = sand.u32 %s55, 1
          %s234 = scalar_lea.sflag [#allocation3], %s233
          %s235 = sand.u32 %s55, 1
          %s236 = smul.addr %s235, 8
          %s237 = scalar_lea.vmem [#allocation2], %s236
          %s239 = ssub.s32 128, 128
          %240 = vsyncadd %s234, %s239
          %s241 = sadd.s32 %s32, %s31
          %s242 = smul.addr %s241, 128
          %s243 = scalar_lea.hbm %s0, %s242
          %s245 = sshll.u32 %s237, 4
          %s246 = int_to_ptr.vmem [resolvable:$true] %s245
          %248 = dma.hbm_to_vmem [thread:$0]  %s243, 128, %s246, %s234
        $region24: #{tpu_custom_call.1} parent=19 // pred_fallthru
          _
        // Predicated region
        $region25: #{tpu_custom_call.1} parent=19 // pred_check
          %p249 = pneg %p93
        $region26: #{tpu_custom_call.1} parent=19 // pred_check_branch
          %251 = sbr.rel (%p249) target = $region28
        $region27: #{tpu_custom_call.1} parent=19 // pred_region
          %s252 = sand.u32 %s24, 1
          %s253 = scalar_lea.sflag [#allocation6], %s252
          %s254 = sand.u32 %s83, 1
          %s255 = smul.addr %s254, 32
          %s256 = scalar_lea.vmem [#allocation5], %s255
          %s258 = ssub.s32 512, 512
          %259 = vsyncadd %s253, %s258
          %s260 = smul.addr %s31, 4
          %s261 = sadd.s32 %s33, %s260
          %s262 = smul.addr %s261, 128
          %s263 = scalar_lea.hbm %s1, %s262
          %s264 = sshll.u32 %s256, 4
          %s265 = int_to_ptr.vmem [resolvable:$true] %s264
          %270 = dma.hbm_to_vmem [thread:$0]  %s263, 512, %s265, %s253, 128, 128, 8
        $region28: #{tpu_custom_call.1} parent=19 // pred_fallthru
          _
        // Predicated region
        $region29: #{tpu_custom_call.1} parent=19 // pred_check
          %p271 = pneg %p121
        $region30: #{tpu_custom_call.1} parent=19 // pred_check_branch
          %273 = sbr.rel (%p271) target = $region32
        $region31: #{tpu_custom_call.1} parent=19 // pred_region
          %s274 = sand.u32 %s24, 1
          %s275 = scalar_lea.sflag [#allocation6], %s274
          %s276 = sand.u32 %s111, 1
          %s277 = smul.addr %s276, 32
          %s278 = scalar_lea.vmem [#allocation7], %s277
          %s280 = ssub.s32 512, 512
          %281 = vsyncadd %s275, %s280
          %s282 = smul.addr %s31, 4
          %s283 = sadd.s32 %s33, %s282
          %s284 = smul.addr %s283, 128
          %s285 = scalar_lea.hbm %s2, %s284
          %s286 = sshll.u32 %s278, 4
          %s287 = int_to_ptr.vmem [resolvable:$true] %s286
          %292 = dma.hbm_to_vmem [thread:$0]  %s285, 512, %s287, %s275, 128, 128, 8
        $region32: #{tpu_custom_call.1} parent=19 // pred_fallthru
          _
      $region20: #{tpu_custom_call.1} parent=5 // pred_fallthru
        _
      %p293 = scmp.le.s32.totalorder 1, %s24
      %p294 = scmp.lt.s32.totalorder %s24, 3
      %p295 = pnand %p293, %p294
      %p296 = pneg %p295
      // Predicated region
      $region33: #{tpu_custom_call.1} parent=5 // pred_check
        _
      $region34: #{tpu_custom_call.1} parent=5 // pred_check_branch
        %298 = sbr.rel (%p295) target = $region36
      $region35: #{tpu_custom_call.1} parent=5 // pred_region
        %s299 = ssub.s32 %s24, 1
        %s300 = sand.u32 %s58, 1
        %s301 = scalar_lea.sflag [#allocation3], %s300
        %s302 = sand.u32 %s58, 1
        %s303 = smul.addr %s302, 8
        %s304 = scalar_lea.vmem [#allocation2], %s303
        // Predicated region
        $region37: #{tpu_custom_call.1} parent=35 // pred_check
          %p305 = pneg %p71
        $region38: #{tpu_custom_call.1} parent=35 // pred_check_branch
          %307 = sbr.rel (%p305) target = $region40
        $region39: #{tpu_custom_call.1} parent=35 // pred_region
          %308 = dma.done %s301, 128
        $region40: #{tpu_custom_call.1} parent=35 // pred_fallthru
          _
        %s309 = sand.u32 %s29, 1
        %s310 = scalar_lea.sflag [#allocation6], %s309
        %s311 = sand.u32 %s86, 1
        %s312 = smul.addr %s311, 32
        %s313 = scalar_lea.vmem [#allocation5], %s312
        // Predicated region
        $region41: #{tpu_custom_call.1} parent=35 // pred_check
          %p314 = pneg %p99
        $region42: #{tpu_custom_call.1} parent=35 // pred_check_branch
          %316 = sbr.rel (%p314) target = $region44
        $region43: #{tpu_custom_call.1} parent=35 // pred_region
          %317 = dma.done %s310, 512
        $region44: #{tpu_custom_call.1} parent=35 // pred_fallthru
          _
        %s318 = sand.u32 %s29, 1
        %s319 = scalar_lea.sflag [#allocation6], %s318
        %s320 = sand.u32 %s114, 1
        %s321 = smul.addr %s320, 32
        %s322 = scalar_lea.vmem [#allocation7], %s321
        // Predicated region
        $region45: #{tpu_custom_call.1} parent=35 // pred_check
          %p323 = pneg %p127
        $region46: #{tpu_custom_call.1} parent=35 // pred_check_branch
          %325 = sbr.rel (%p323) target = $region48
        $region47: #{tpu_custom_call.1} parent=35 // pred_region
          %326 = dma.done %s319, 512
        $region48: #{tpu_custom_call.1} parent=35 // pred_fallthru
          _
        %s327 = sand.u32 %s58, 1
        %s328 = scalar_lea.sflag [#allocation3], %s327
        %s329 = sand.u32 %s58, 1
        %s330 = smul.addr %s329, 8
        %s331 = scalar_lea.vmem [#allocation2], %s330
        %p332 = pneg %p71
        %p333 = pneg %p68
        %s334 = sand.u32 %s29, 1
        %s335 = scalar_lea.sflag [#allocation6], %s334
        %s336 = sand.u32 %s86, 1
        %s337 = smul.addr %s336, 32
        %s338 = scalar_lea.vmem [#allocation5], %s337
        %p339 = pneg %p99
        %p340 = pneg %p96
        %s341 = sand.u32 %s29, 1
        %s342 = scalar_lea.sflag [#allocation6], %s341
        %s343 = sand.u32 %s114, 1
        %s344 = smul.addr %s343, 32
        %s345 = scalar_lea.vmem [#allocation7], %s344
        %p346 = pneg %p127
        %p347 = pneg %p124
        %p348 = pneg %p148
        %p349 = pneg %p145
        %p350 = pneg %p178
        %p351 = pneg %p175
        %s352 = sand.u32 %s165, 1
        %s353 = scalar_lea.sflag [#allocation4], %s352
        %s354 = sand.u32 %s165, 1
        %s355 = smul.addr %s354, 8
        %s356 = scalar_lea.vmem [#allocation8], %s355
        %p357 = pneg %p208
        %p358 = pneg %p205
        %s359 = sand.u32 %s195, 1
        %s360 = scalar_lea.sflag [#allocation10], %s359
        %s361 = sand.u32 %s195, 1
        %s362 = smul.addr %s361, 8
        %s363 = scalar_lea.vmem [#allocation9], %s362
        %v364 = vld [vmem:[%s304] sm:$0xff]
        %v365 = vld [vmem:[%s313] sm:$0xff]
        %v366 = vld [vmem:[%s313 + $0x8] sm:$0xff]
        %v367 = vld [vmem:[%s313 + $0x10] sm:$0xff]
        %v368 = vld [vmem:[%s313 + $0x18] sm:$0xff]
        %v369 = vld [vmem:[%s322] sm:$0xff]
        %v370 = vld [vmem:[%s322 + $0x8] sm:$0xff]
        %v371 = vld [vmem:[%s322 + $0x10] sm:$0xff]
        %v372 = vld [vmem:[%s322 + $0x18] sm:$0xff]
        %v373 = vld [vmem:[%s3] sm:$0x1]
        %v375 = vlaneseq
        %v376 = vshrl.u32 %v375, 7
        %v377 = vsub.s32 0, %v376
        %v378 = vrot.slane %v373, %v377
        %vm380 = vcmask 261120
        %v382 = vsel %vm380, %v364, 0
        %384 = vmatprep.subr.mxu0 0.0
        %385 = vmatpush1.msra.mxu0 %v369
        %386 = vmatprep.subr.mxu0 0.0
        %387 = vmatpush1.msra.mxu0 %v370
        %388 = vmatprep.subr.mxu0 0.0
        %389 = vmatpush1.msra.mxu0 %v371
        %390 = vmatprep.subr.mxu0 0.0
        %391 = vmatpush1.msra.mxu0 %v372
        %392 = vmatprep.subr.mxu0 0.0
        %393 = vmatpush1.msra.mxu0 0.0
        %394 = vmatprep.subr.mxu0 0.0
        %395 = vmatpush1.msra.mxu0 0.0
        %396 = vmatprep.subr.mxu0 0.0
        %397 = vmatpush1.msra.mxu0 0.0
        %398 = vmatprep.subr.mxu0 0.0
        %399 = vmatpush1.msra.mxu0 0.0
        %400 = vmatprep.subr.mxu0 0.0
        %401 = vmatpush1.msra.mxu0 0.0
        %402 = vmatprep.subr.mxu0 0.0
        %403 = vmatpush1.msra.mxu0 0.0
        %404 = vmatprep.subr.mxu0 0.0
        %405 = vmatpush1.msra.mxu0 0.0
        %406 = vmatprep.subr.mxu0 0.0
        %407 = vmatpush1.msra.mxu0 0.0
        %408 = vmatprep.subr.mxu0 0.0
        %409 = vmatpush1.msra.mxu0 0.0
        %410 = vmatprep.subr.mxu0 0.0
        %411 = vmatpush1.msra.mxu0 0.0
        %412 = vmatprep.subr.mxu0 0.0
        %413 = vmatpush1.msra.mxu0 0.0
        %414 = vmatprep.subr.mxu0 0.0
        %415 = vmatpush1.msra.mxu0 0.0
        %416 = vmatprep.subr.mxu0 0.0
        %417 = vmatpush1.msra.mxu0 0.0
        %418 = vmatprep.subr.mxu0 0.0
        %419 = vmatpush1.msra.mxu0 0.0
        %420 = vmatprep.subr.mxu0 0.0
        %421 = vmatpush1.msra.mxu0 0.0
        %422 = vmatprep.subr.mxu0 0.0
        %423 = vmatpush1.msra.mxu0 0.0
        %424 = vmatprep.subr.mxu0 0.0
        %425 = vmatpush1.msra.mxu0 0.0
        %426 = vmatprep.subr.mxu0 0.0
        %427 = vmatpush1.msra.mxu0 0.0
        %428 = vmatprep.subr.mxu0 0.0
        %429 = vmatpush1.msra.mxu0 0.0
        %430 = vmatprep.subr.mxu0 0.0
        %431 = vmatpush1.msra.mxu0 0.0
        %432 = vmatprep.subr.mxu0 0.0
        %433 = vmatpush1.msra.mxu0 0.0
        %434 = vmatprep.subr.mxu0 0.0
        %435 = vmatpush1.msra.mxu0 0.0
        %436 = vmatprep.subr.mxu0 0.0
        %437 = vmatpush1.msra.mxu0 0.0
        %438 = vmatprep.subr.mxu0 0.0
        %439 = vmatpush1.msra.mxu0 0.0
        %440 = vmatprep.subr.mxu0 0.0
        %441 = vmatpush1.msra.mxu0 0.0
        %442 = vmatprep.subr.mxu0 0.0
        %443 = vmatpush1.msra.mxu0 0.0
        %444 = vmatprep.subr.mxu0 0.0
        %445 = vmatpush1.msra.mxu0 0.0
        %446 = vmatprep.subr.mxu0 0.0
        %447 = vmatpush1.msra.mxu0 0.0
        %448 = vmatprep.mubr.f32.mxu0 0.0
        %449 = vmatmul.mubr.f32.gmra.mrb[0].mxu0 %v382
        %v450 = vpop.f32.mrb[0].mxu0
        %v451 = vadd.f32 %v378, %v450
        %v452 = vpop.f32.mrb[0].mxu0
        %453 = vdwg.mxu0
        %454 = vst [vmem:[%s356] sm:$0xff] %v451
        %v455 = vmul.f32 %v364, %v364
        %v456 = vsel %vm380, %v455, 0.0
        %457 = vadd.xlane.f32.xlu0 %v456
        %v458 = vpop.xlane.xlu0 %457
        %v459 = vmul.f32 %v365, %v365
        %v460 = vmul.f32 %v366, %v366
        %v461 = vmul.f32 %v367, %v367
        %v462 = vmul.f32 %v368, %v368
        %vm463 = vcmask 523264
        %v464 = vsel %vm463, %v459, 0.0
        %v465 = vsel %vm463, %v460, 0.0
        %v466 = vadd.f32 %v464, %v465
        %v467 = vsel %vm463, %v461, 0.0
        %v468 = vadd.f32 %v466, %v467
        %v469 = vsel %vm463, %v462, 0.0
        %v470 = vadd.f32 %v468, %v469
        %v471 = vrot.slane %v470, 4
        %v472 = vadd.f32 %v470, %v471
        %v473 = vrot.slane %v472, 2
        %v474 = vadd.f32 %v472, %v473
        %v475 = vrot.slane %v474, 1
        %v476 = vadd.f32 %v474, %v475
        %v477 = vrsqrt.pop %v458
        %v478 = vmul.f32 %v458, %v477
        %vm479 = vcmp.eq.f32.partialorder %v458, inf
        %v480 = vsel %vm479, %v458, %v478
        %vm481 = vcmp.eq.f32.partialorder %v458, 0.0
        %v482 = vand.u32 %v458, 2147483648
        %v483 = vsel %vm481, %v482, %v480
        %v484 = vadd.f32 %v483, 1e-06
        %v485 = vrcp.pop %v484
        %v486 = vrsqrt.pop %v476
        %v487 = vmul.f32 %v476, %v486
        %vm488 = vcmp.eq.f32.partialorder %v476, inf
        %v489 = vsel %vm488, %v476, %v487
        %vm490 = vcmp.eq.f32.partialorder %v476, 0.0
        %v491 = vand.u32 %v476, 2147483648
        %v492 = vsel %vm490, %v491, %v489
        %v493 = vadd.f32 %v492, 1e-06
        %v494 = vrcp.pop %v493
        %495 = vmatprep.subr.mxu0 0.0
        %496 = vmatpush1.msra.mxu0 %v365
        %497 = vmatprep.subr.mxu0 0.0
        %498 = vmatpush1.msra.mxu0 %v366
        %499 = vmatprep.subr.mxu0 0.0
        %500 = vmatpush1.msra.mxu0 %v367
        %501 = vmatprep.subr.mxu0 0.0
        %502 = vmatpush1.msra.mxu0 %v368
        %503 = vmatprep.subr.mxu0 0.0
        %504 = vmatpush1.msra.mxu0 0.0
        %505 = vmatprep.subr.mxu0 0.0
        %506 = vmatpush1.msra.mxu0 0.0
        %507 = vmatprep.subr.mxu0 0.0
        %508 = vmatpush1.msra.mxu0 0.0
        %509 = vmatprep.subr.mxu0 0.0
        %510 = vmatpush1.msra.mxu0 0.0
        %511 = vmatprep.subr.mxu0 0.0
        %512 = vmatpush1.msra.mxu0 0.0
        %513 = vmatprep.subr.mxu0 0.0
        %514 = vmatpush1.msra.mxu0 0.0
        %515 = vmatprep.subr.mxu0 0.0
        %516 = vmatpush1.msra.mxu0 0.0
        %517 = vmatprep.subr.mxu0 0.0
        %518 = vmatpush1.msra.mxu0 0.0
        %519 = vmatprep.subr.mxu0 0.0
        %520 = vmatpush1.msra.mxu0 0.0
        %521 = vmatprep.subr.mxu0 0.0
        %522 = vmatpush1.msra.mxu0 0.0
        %523 = vmatprep.subr.mxu0 0.0
        %524 = vmatpush1.msra.mxu0 0.0
        %525 = vmatprep.subr.mxu0 0.0
        %526 = vmatpush1.msra.mxu0 0.0
        %527 = vmatprep.subr.mxu0 0.0
        %528 = vmatpush1.msra.mxu0 0.0
        %529 = vmatprep.subr.mxu0 0.0
        %530 = vmatpush1.msra.mxu0 0.0
        %531 = vmatprep.subr.mxu0 0.0
        %532 = vmatpush1.msra.mxu0 0.0
        %533 = vmatprep.subr.mxu0 0.0
        %534 = vmatpush1.msra.mxu0 0.0
        %535 = vmatprep.subr.mxu0 0.0
        %536 = vmatpush1.msra.mxu0 0.0
        %537 = vmatprep.subr.mxu0 0.0
        %538 = vmatpush1.msra.mxu0 0.0
        %539 = vmatprep.subr.mxu0 0.0
        %540 = vmatpush1.msra.mxu0 0.0
        %541 = vmatprep.subr.mxu0 0.0
        %542 = vmatpush1.msra.mxu0 0.0
        %543 = vmatprep.subr.mxu0 0.0
        %544 = vmatpush1.msra.mxu0 0.0
        %545 = vmatprep.subr.mxu0 0.0
        %546 = vmatpush1.msra.mxu0 0.0
        %547 = vmatprep.subr.mxu0 0.0
        %548 = vmatpush1.msra.mxu0 0.0
        %549 = vmatprep.subr.mxu0 0.0
        %550 = vmatpush1.msra.mxu0 0.0
        %551 = vmatprep.subr.mxu0 0.0
        %552 = vmatpush1.msra.mxu0 0.0
        %553 = vmatprep.subr.mxu0 0.0
        %554 = vmatpush1.msra.mxu0 0.0
        %555 = vmatprep.subr.mxu0 0.0
        %556 = vmatpush1.msra.mxu0 0.0
        %557 = vmatprep.subr.mxu0 0.0
        %558 = vmatpush1.msra.mxu0 0.0
        %559 = vmatprep.mubr.f32.mxu0 0.0
        %560 = vmatmul.mubr.f32.gmra.mrb[0].mxu0 %v382
        %v561 = vpop.f32.mrb[0].mxu0
        %v562 = vadd.f32 0.0, %v561
        %v563 = vpop.f32.mrb[0].mxu0
        %564 = vdwg.mxu0
        %v565 = vmul.f32 %v562, %v485
        %v566 = vmul.f32 %v565, %v494
        %v567 = vmul.f32 %v458, %v485
        %v568 = vmul.f32 %v567, %v485
        %v569 = vmul.f32 %v476, %v494
        %v570 = vmul.f32 %v569, %v494
        %v571 = vadd.f32 %v568, %v570
        %v572 = vmul.f32 %v566, 2.0
        %v573 = vsub.f32 %v571, %v572
        %v574 = vmax.f32 %v573, 0.0
        %v575 = vrsqrt.pop %v574
        %v576 = vmul.f32 %v574, %v575
        %vm577 = vcmp.eq.f32.partialorder %v574, inf
        %v578 = vsel %vm577, %v574, %v576
        %vm579 = vcmp.eq.f32.partialorder %v574, 0.0
        %v580 = vand.u32 %v574, 2147483648
        %v581 = vsel %vm579, %v580, %v578
        %582 = vst.msk [vmem:[%s363] sm:$0xff] %vm463, %v581
        %s583 = sand.u32 %s165, 1
        %s584 = scalar_lea.sflag [#allocation4], %s583
        %s585 = sand.u32 %s165, 1
        %s586 = smul.addr %s585, 8
        %s587 = scalar_lea.vmem [#allocation8], %s586
        %s588 = sand.u32 %s195, 1
        %s589 = scalar_lea.sflag [#allocation10], %s588
        %s590 = sand.u32 %s195, 1
        %s591 = smul.addr %s590, 8
        %s592 = scalar_lea.vmem [#allocation9], %s591
        // Predicated region
        $region49: #{tpu_custom_call.1} parent=35 // pred_check
          %p593 = pneg %p175
        $region50: #{tpu_custom_call.1} parent=35 // pred_check_branch
          %595 = sbr.rel (%p593) target = $region52
        $region51: #{tpu_custom_call.1} parent=35 // pred_region
          %s597 = ssub.s32 128, 128
          %598 = vsyncadd %s584, %s597
          %s599 = sadd.s32 %s36, %s35
          %s600 = sadd.s32 %s599, %s34
          %s601 = smul.addr %s600, 128
          %s602 = scalar_lea.hbm %s4, %s601
          %s604 = sshll.u32 %s587, 4
          %s605 = int_to_ptr.vmem [resolvable:$true] %s604
          %607 = dma.vmem_to_hbm [thread:$0]  %s605, 128, %s602, %s584
        $region52: #{tpu_custom_call.1} parent=35 // pred_fallthru
          _
        // Predicated region
        $region53: #{tpu_custom_call.1} parent=35 // pred_check
          %p608 = pneg %p205
        $region54: #{tpu_custom_call.1} parent=35 // pred_check_branch
          %610 = sbr.rel (%p608) target = $region56
        $region55: #{tpu_custom_call.1} parent=35 // pred_region
          %s612 = ssub.s32 128, 128
          %613 = vsyncadd %s589, %s612
          %s614 = sadd.s32 %s36, %s35
          %s615 = sadd.s32 %s614, %s34
          %s616 = smul.addr %s615, 128
          %s617 = scalar_lea.hbm %s5, %s616
          %s619 = sshll.u32 %s592, 4
          %s620 = int_to_ptr.vmem [resolvable:$true] %s619
          %622 = dma.vmem_to_hbm [thread:$0]  %s620, 128, %s617, %s589
        $region56: #{tpu_custom_call.1} parent=35 // pred_fallthru
          _
      $region36: #{tpu_custom_call.1} parent=5 // pred_fallthru
        _
      %p623 = scmp.le.s32.totalorder 2, %s24
      // Predicated region
      $region57: #{tpu_custom_call.1} parent=5 // pred_check
        %p624 = pneg %p623
      $region58: #{tpu_custom_call.1} parent=5 // pred_check_branch
        %626 = sbr.rel (%p624) target = $region60
      $region59: #{tpu_custom_call.1} parent=5 // pred_region
        %s627 = ssub.s32 %s24, 2
        // Predicated region
        $region61: #{tpu_custom_call.1} parent=59 // pred_check
          %p628 = pneg %p181
        $region62: #{tpu_custom_call.1} parent=59 // pred_check_branch
          %630 = sbr.rel (%p628) target = $region64
        $region63: #{tpu_custom_call.1} parent=59 // pred_region
          %s631 = sand.u32 %s166, 1
          %s632 = scalar_lea.sflag [#allocation4], %s631
          %s633 = sand.u32 %s166, 1
          %s634 = smul.addr %s633, 8
          %s635 = scalar_lea.vmem [#allocation8], %s634
          %636 = dma.done %s632, 128
        $region64: #{tpu_custom_call.1} parent=59 // pred_fallthru
          _
        // Predicated region
        $region65: #{tpu_custom_call.1} parent=59 // pred_check
          %p637 = pneg %p211
        $region66: #{tpu_custom_call.1} parent=59 // pred_check_branch
          %639 = sbr.rel (%p637) target = $region68
        $region67: #{tpu_custom_call.1} parent=59 // pred_region
          %s640 = sand.u32 %s196, 1
          %s641 = scalar_lea.sflag [#allocation10], %s640
          %s642 = sand.u32 %s196, 1
          %s643 = smul.addr %s642, 8
          %s644 = scalar_lea.vmem [#allocation9], %s643
          %645 = dma.done %s641, 128
        $region68: #{tpu_custom_call.1} parent=59 // pred_fallthru
          _
      $region60: #{tpu_custom_call.1} parent=5 // pred_fallthru
        _
    $region6: #{tpu_custom_call.1} parent=1 // loop_footer
      %s28 = sadd.s32 1, %s24
    $region7: #{tpu_custom_call.1} parent=1 // loop_footer_branch
      %23 = sbr.rel target = $region3
    $region8: #{tpu_custom_call.1} parent=1 // loop_exit
      _
    %646 = vsyncpa [#allocation3], 1
    %s647 = scalar_lea.sflag [#allocation3], 1
    %648 = vsyncpa %s647, 1
    %649 = vsyncpa [#allocation6], 1
    %s650 = scalar_lea.sflag [#allocation6], 1
    %651 = vsyncpa %s650, 1
    %652 = vsyncpa [#allocation4], 1
    %s653 = scalar_lea.sflag [#allocation4], 1
    %654 = vsyncpa %s653, 1
    %655 = vsyncpa [#allocation10], 1
    %s656 = scalar_lea.sflag [#allocation10], 1
    %657 = vsyncpa %s656, 1

</llo_original>
